<compile_context>
chip_gen: v7x
topology: tpu7x:2x2x1
jax: 0.10.0
libtpu: 0.0.40
codegen_flags: <defaults>
</compile_context>

<pallas_src>
import jax
import jax.numpy as jnp
from jax.experimental import pallas as pl
from jax.experimental.pallas import tpu as pltpu

_LANES = 512                      # lane-dense last dim (multiple of 128)
_SUBLANES = 16                    # second-last dim (bf16-packing friendly)
_SLAB = _SUBLANES * _LANES        # elements per slab (8192)
_MAX_SLABS_PER_TILE = 128         # <= 4 MiB f32 per input tile
_NUM_SPLITS = 2                   # leading "parallel" axis (v7x dual-TC)


def _sn_dis_loss_kernel(pos_ref, neg_ref, out_ref, acc_ref):
    t = pl.program_id(1)

    # Zero the resident wide accumulator on the first reduction step of each split.
    @pl.when(t == 0)
    def _init():
        acc_ref[...] = jnp.zeros_like(acc_ref)

    # Fused elementwise diff; accumulate wide (VPU-only per tile, no XLU).
    diff = neg_ref[...].astype(jnp.float32) - pos_ref[...].astype(jnp.float32)
    acc_ref[...] += jnp.sum(diff, axis=0)

    # Finalize: single cross-lane/sublane reduction per split.
    @pl.when(t == pl.num_programs(1) - 1)
    def _finalize():
        s = jnp.sum(acc_ref[...], keepdims=True)          # (1, 1)
        out_ref[...] = s.reshape(1, 1, 1)


def sn_dis_loss(pos, neg):
    """Pallas implementation of SNDisLoss.forward(pos, neg)."""
    assert pos.shape == neg.shape, "real/fake score maps must match in shape"
    n = pos.size

    slabs_needed = pl.cdiv(n, _SLAB)
    slabs_per_tile = min(_MAX_SLABS_PER_TILE, slabs_needed)
    tiles_per_split = pl.cdiv(slabs_needed, _NUM_SPLITS * slabs_per_tile)
    total_slabs = _NUM_SPLITS * tiles_per_split * slabs_per_tile
    padded = total_slabs * _SLAB

    def _prep(x):
        flat = jnp.reshape(x, (-1,))
        if padded != n:
            flat = jnp.pad(flat, (0, padded - n))
        return jnp.reshape(flat, (total_slabs, _SUBLANES, _LANES))

    pos3 = _prep(pos)
    neg3 = _prep(neg)

    tile = (slabs_per_tile, _SUBLANES, _LANES)
    in_map = lambda c, t: (c * tiles_per_split + t, 0, 0)

    partials = pl.pallas_call(
        _sn_dis_loss_kernel,
        out_shape=jax.ShapeDtypeStruct((_NUM_SPLITS, 1, 1), jnp.float32),
        grid_spec=pltpu.PrefetchScalarGridSpec(
            num_scalar_prefetch=0,
            grid=(_NUM_SPLITS, tiles_per_split),
            in_specs=[
                pl.BlockSpec(tile, in_map),
                pl.BlockSpec(tile, in_map),
            ],
            out_specs=pl.BlockSpec((1, 1, 1), lambda c, t: (c, 0, 0)),
            scratch_shapes=[
                pltpu.VMEM((_SUBLANES, _LANES), jnp.float32),  # wide sum(neg - pos)
            ],
        ),
        compiler_params=pltpu.CompilerParams(
            dimension_semantics=("parallel", "arbitrary"),
            vmem_limit_bytes=32 * 1024 * 1024,
        ),
    )(pos3, neg3)

    # mean(1 - pos) + mean(1 + neg) == 2 + (sum(neg) - sum(pos)) / N
    return 2.0 + jnp.sum(partials) / n


if __name__ == "__main__":
    key = jax.random.PRNGKey(0)
    k_pos, k_neg = jax.random.split(key)

    # Patch-GAN style discriminator outputs for real (pos) and fake (neg)
    # batches, NCHW layout (SNDisLoss has no parameters of its own).
    pos = jax.random.normal(k_pos, (2, 4, 16, 16), dtype=jnp.float32)
    neg = jax.random.normal(k_neg, (2, 4, 16, 16), dtype=jnp.float32)

    loss = sn_dis_loss(pos, neg)
    loss = jax.block_until_ready(loss)

    # Pure-JAX reference of the PyTorch forward.
    ref = jnp.mean(1.0 - pos) + jnp.mean(1.0 + neg)
    assert jnp.allclose(loss, ref, atol=1e-5, rtol=1e-5), (loss, ref)

    print("KERNEL_OK")
</pallas_src>

<mosaic_0001>
module attributes {stable_mosaic.version = 11 : i64} {
  func.func @_sn_dis_loss_kernel(%arg0: i32, %arg1: i32, %arg2: memref<1x16x512xf32, #tpu.memory_space<vmem>>, %arg3: memref<1x16x512xf32, #tpu.memory_space<vmem>>, %arg4: memref<1x1x1xf32, #tpu.memory_space<vmem>>, %arg5: memref<16x512xf32, #tpu.memory_space<vmem>>) attributes {dimension_semantics = [#tpu.dimension_semantics<parallel>, #tpu.dimension_semantics<arbitrary>], iteration_bounds = array<i64: 2, 1>, scalar_prefetch = 0 : i64, scratch_operands = 1 : i64, tpu.core_type = #tpu.core_type<tc>, window_params = [{transform_indices = @transform_0, window_bounds = array<i64: 1, 16, 512>}, {transform_indices = @transform_1, window_bounds = array<i64: 1, 16, 512>}, {transform_indices = @transform_2, window_bounds = array<i64: 1, 1, 1>}]} {
    %c0_i32 = arith.constant 0 : i32
    %0 = arith.cmpi eq, %arg1, %c0_i32 : i32
    %1 = arith.extui %0 : i1 to i32
    %c0_i32_0 = arith.constant 0 : i32
    %2 = arith.cmpi ne, %1, %c0_i32_0 : i32
    scf.if %2 {
      %cst_12 = arith.constant 0.000000e+00 : f32
      %13 = vector.broadcast %cst_12 : f32 to vector<16x512xf32>
      %c0_13 = arith.constant 0 : index
      %c0_14 = arith.constant 0 : index
      %14 = vector.load %arg5[%c0_13, %c0_14] : memref<16x512xf32, #tpu.memory_space<vmem>>, vector<16x512xf32>
      tpu.vector_store %arg5[%c0_13, %c0_14], %13 {strides = array<i32>} : memref<16x512xf32, #tpu.memory_space<vmem>>, vector<16x512xf32>,
    } else {
    }
    %c0 = arith.constant 0 : index
    %c0_1 = arith.constant 0 : index
    %c0_2 = arith.constant 0 : index
    %3 = vector.load %arg3[%c0, %c0_1, %c0_2] : memref<1x16x512xf32, #tpu.memory_space<vmem>>, vector<1x16x512xf32>
    %c0_3 = arith.constant 0 : index
    %c0_4 = arith.constant 0 : index
    %c0_5 = arith.constant 0 : index
    %4 = vector.load %arg2[%c0_3, %c0_4, %c0_5] : memref<1x16x512xf32, #tpu.memory_space<vmem>>, vector<1x16x512xf32>
    %5 = arith.subf %3, %4 : vector<1x16x512xf32>
    %c0_6 = arith.constant 0 : index
    %c0_7 = arith.constant 0 : index
    %6 = vector.load %arg5[%c0_6, %c0_7] : memref<16x512xf32, #tpu.memory_space<vmem>>, vector<16x512xf32>
    %cst = arith.constant dense<0.000000e+00> : vector<16x512xf32>
    %7 = vector.multi_reduction <add>, %5, %cst [0] : vector<1x16x512xf32> to vector<16x512xf32>
    %8 = arith.addf %6, %7 : vector<16x512xf32>
    %c0_8 = arith.constant 0 : index
    %c0_9 = arith.constant 0 : index
    %9 = vector.load %arg5[%c0_8, %c0_9] : memref<16x512xf32, #tpu.memory_space<vmem>>, vector<16x512xf32>
    tpu.vector_store %arg5[%c0_8, %c0_9], %8 {strides = array<i32>} : memref<16x512xf32, #tpu.memory_space<vmem>>, vector<16x512xf32>,
    %c0_i32_10 = arith.constant 0 : i32
    %10 = arith.cmpi eq, %arg1, %c0_i32_10 : i32
    %11 = arith.extui %10 : i1 to i32
    %c0_i32_11 = arith.constant 0 : i32
    %12 = arith.cmpi ne, %11, %c0_i32_11 : i32
    scf.if %12 {
      %c0_12 = arith.constant 0 : index
      %c0_13 = arith.constant 0 : index
      %13 = vector.load %arg5[%c0_12, %c0_13] : memref<16x512xf32, #tpu.memory_space<vmem>>, vector<16x512xf32>
      %14 = vector.shape_cast %13 : vector<16x512xf32> to vector<1x16x512xf32>
      %cst_14 = arith.constant dense<0.000000e+00> : vector<1xf32>
      %15 = vector.multi_reduction <add>, %14, %cst_14 [1, 2] : vector<1x16x512xf32> to vector<1xf32>
      %16 = vector.shape_cast %15 : vector<1xf32> to vector<1x1x1xf32>
      %17 = vector.extract %16[0, 0, 0] : f32 from vector<1x1x1xf32>
      %18 = vector.broadcast %17 : f32 to vector<1x1xf32>
      %19 = vector.shape_cast %18 : vector<1x1xf32> to vector<1x1x1xf32>
      %c0_15 = arith.constant 0 : index
      %c0_16 = arith.constant 0 : index
      %c0_17 = arith.constant 0 : index
      %20 = vector.load %arg4[%c0_15, %c0_16, %c0_17] : memref<1x1x1xf32, #tpu.memory_space<vmem>>, vector<1x1x1xf32>
      tpu.vector_store %arg4[%c0_15, %c0_16, %c0_17], %19 {strides = array<i32>} : memref<1x1x1xf32, #tpu.memory_space<vmem>>, vector<1x1x1xf32>,
    } else {
    }
    return
  }
  func.func @transform_0(%arg0: i32, %arg1: i32) -> (i32, i32, i32) {
    %c1_i32 = arith.constant 1 : i32
    %0 = arith.muli %arg0, %c1_i32 : i32
    %1 = arith.addi %0, %arg1 : i32
    %c0_i32 = arith.constant 0 : i32
    %c0_i32_0 = arith.constant 0 : i32
    %c0_i32_1 = arith.constant 0 : i32
    return %1, %c0_i32, %c0_i32_0 : i32, i32, i32
  }
  func.func @transform_1(%arg0: i32, %arg1: i32) -> (i32, i32, i32) {
    %c1_i32 = arith.constant 1 : i32
    %0 = arith.muli %arg0, %c1_i32 : i32
    %1 = arith.addi %0, %arg1 : i32
    %c0_i32 = arith.constant 0 : i32
    %c0_i32_0 = arith.constant 0 : i32
    %c0_i32_1 = arith.constant 0 : i32
    return %1, %c0_i32, %c0_i32_0 : i32, i32, i32
  }
  func.func @transform_2(%arg0: i32, %arg1: i32) -> (i32, i32, i32) {
    %c0_i32 = arith.constant 0 : i32
    %c0_i32_0 = arith.constant 0 : i32
    %c0_i32_1 = arith.constant 0 : i32
    return %arg0, %c0_i32, %c0_i32_0 : i32, i32, i32
  }
}

</mosaic_0001>

<llo_original>
// kernel: tpu_custom_call.1
$region0: #{tpu_custom_call.1}
  #allocation0 [shape = 'u32[]', space=smem, size = 0x4, offset = 0x4, fixed_abs, tag = 'smem constant byte address 0x4 - core index']
  #allocation1 [shape = 'u32[144,128]{1,0:T(1,128)}', space=vmem, size = 0x12000, scoped, tag = 'internal scratch']
  #allocation2 [shape = 'f32[16,512]{1,0:T(8,128)}', space=vmem, size = 0x8000, scoped, tag = 'scratch operand']
  %s0 = inlined_call_operand.hbm [shape: f32[2,16,512], index: 0, kind: input, shape index: {}]
  %s1 = inlined_call_operand.hbm [shape: f32[2,16,512], index: 1, kind: input, shape index: {}]
  %s2 = inlined_call_operand.vmem [shape: f32[2,1,1], index: 2, kind: output, shape index: {}]
  %s3 = sld [smem:[#allocation0]]
  $region57: #{tpu_custom_call.1} parent=0
    _
  %s5 = ssub.s32 1, %s3
  %s6 = scalar_select 0, %s5, %s3
  $region1: #{tpu_custom_call.1} parent=0
    #allocation3 [shape = 'u8[65536]{0}', space=vmem, size = 0x10000, scoped, tag = 'input window, operand 0']
    #allocation4 [shape = 's32[2]{0}', space=sflag, size = 0x8, scoped, tag = 'scoped memory for tpu_custom_call.1']
    #allocation5 [shape = 'u8[65536]{0}', space=vmem, size = 0x10000, scoped, tag = 'input window, operand 1']
    #allocation6 [shape = 's32[2]{0}', space=sflag, size = 0x8, scoped, tag = 'scoped memory for tpu_custom_call.1']
    %7 = vsyncpa [#allocation4], 0
    %s8 = scalar_lea.sflag [#allocation4], 1
    %9 = vsyncpa %s8, 0
    %10 = vsyncpa [#allocation6], 0
    %s11 = scalar_lea.sflag [#allocation6], 1
    %12 = vsyncpa %s11, 0
    loop: start=0, step=1, limit=4
    $region2: #{tpu_custom_call.1} parent=1 // loop_pre_header
      _
    $region3: #{tpu_custom_call.1} parent=1 // loop_header
      %s14 = sphi 0, %s18
      %p15 = scmp.ge.s32.totalorder %s14, 4
      %s21 = sphi 0, %s33
      %s22 = sphi 0, %s29
      %s23 = sphi 0, %s21
      %s24 = sphi 0, %s22
      %s25 = sphi 0, %s23
      %s26 = sphi 0, %s24
      %s38 = sphi 0, %s40
      %s41 = sphi 0, %s38
      %s42 = sphi 0, %s41
      %s58 = sphi 0, %s42
      %s66 = sphi 0, %s68
      %s69 = sphi 0, %s66
      %s70 = sphi 0, %s69
      %s86 = sphi 0, %s70
      %s92 = sphi 0, %s94
      %s95 = sphi 0, %s92
      %s96 = sphi 0, %s95
      %s112 = sphi 0, %s96
    $region4: #{tpu_custom_call.1} parent=1 // loop_header_branch
      %17 = sbr.rel (%p15) target = $region8
    $region5: #{tpu_custom_call.1} parent=1 // loop_body
      %s19 = ssub.s32 %s14, 1
      %s20 = ssub.s32 %s14, 2
      %s27 = sadd.s32 1, %s22
      %p28 = scmp.ge.s32.totalorder %s27, 1
      %s29 = scalar_select %p28, 0, %s27
      %s30 = sadd.s32 1, %s21
      %s31 = scalar_select %p28, %s30, %s21
      %p32 = scmp.ge.s32.totalorder %s31, 2
      %s33 = scalar_select %p32, 0, %s31
      %s34 = sadd.s32 %s21, %s22
      %s35 = sadd.s32 %s33, %s29
      %s36 = ssub.s32 %s34, %s35
      %p37 = scmp.eq.s32.totalorder %s36, 0
      %s39 = sadd.s32 %s38, 1
      %s40 = scalar_select %p37, %s38, %s39
      %p43 = pneg %p37
      %p44 = scmp.eq.s32.totalorder %s14, 1
      %p45 = por %p43, %p44
      %p46 = scmp.ne.s32.totalorder %s38, %s41
      %p47 = scmp.eq.s32.totalorder %s14, 0
      %p48 = por %p46, %p47
      %p49 = scmp.ne.s32.totalorder %s38, %s41
      %p50 = scmp.eq.s32.totalorder %s19, 1
      %p51 = por %p49, %p50
      %p52 = scmp.ne.s32.totalorder %s41, %s42
      %p53 = scmp.eq.s32.totalorder %s19, 0
      %p54 = por %p52, %p53
      %p55 = scmp.ne.s32.totalorder %s41, %s42
      %p56 = scmp.eq.s32.totalorder %s20, 1
      %p57 = por %p55, %p56
      %p59 = scmp.ne.s32.totalorder %s42, %s58
      %p60 = scmp.eq.s32.totalorder %s20, 0
      %p61 = por %p59, %p60
      %s62 = sadd.s32 %s21, %s22
      %s63 = sadd.s32 %s33, %s29
      %s64 = ssub.s32 %s62, %s63
      %p65 = scmp.eq.s32.totalorder %s64, 0
      %s67 = sadd.s32 %s66, 1
      %s68 = scalar_select %p65, %s66, %s67
      %p71 = pneg %p65
      %p72 = scmp.eq.s32.totalorder %s14, 1
      %p73 = por %p71, %p72
      %p74 = scmp.ne.s32.totalorder %s66, %s69
      %p75 = scmp.eq.s32.totalorder %s14, 0
      %p76 = por %p74, %p75
      %p77 = scmp.ne.s32.totalorder %s66, %s69
      %p78 = scmp.eq.s32.totalorder %s19, 1
      %p79 = por %p77, %p78
      %p80 = scmp.ne.s32.totalorder %s69, %s70
      %p81 = scmp.eq.s32.totalorder %s19, 0
      %p82 = por %p80, %p81
      %p83 = scmp.ne.s32.totalorder %s69, %s70
      %p84 = scmp.eq.s32.totalorder %s20, 1
      %p85 = por %p83, %p84
      %p87 = scmp.ne.s32.totalorder %s70, %s86
      %p88 = scmp.eq.s32.totalorder %s20, 0
      %p89 = por %p87, %p88
      %s90 = ssub.s32 %s21, %s33
      %p91 = scmp.eq.s32.totalorder %s90, 0
      %s93 = sadd.s32 %s92, 1
      %s94 = scalar_select %p91, %s92, %s93
      %p97 = pneg %p91
      %p98 = scmp.eq.s32.totalorder %s14, 1
      %p99 = por %p97, %p98
      %p100 = scmp.ne.s32.totalorder %s92, %s95
      %p101 = scmp.eq.s32.totalorder %s14, 0
      %p102 = por %p100, %p101
      %p103 = scmp.ne.s32.totalorder %s92, %s95
      %p104 = scmp.eq.s32.totalorder %s19, 1
      %p105 = por %p103, %p104
      %p106 = scmp.ne.s32.totalorder %s95, %s96
      %p107 = scmp.eq.s32.totalorder %s19, 0
      %p108 = por %p106, %p107
      %p109 = scmp.ne.s32.totalorder %s95, %s96
      %p110 = scmp.eq.s32.totalorder %s20, 1
      %p111 = por %p109, %p110
      %p113 = scmp.ne.s32.totalorder %s96, %s112
      %p114 = scmp.eq.s32.totalorder %s20, 0
      %p115 = por %p113, %p114
      %p116 = scmp.le.s32.totalorder 1, %s14
      %p117 = scmp.lt.s32.totalorder %s14, 3
      %p118 = pnand %p116, %p117
      %p119 = pneg %p118
      // Predicated region
      $region9: #{tpu_custom_call.1} parent=5 // pred_check
        _
      $region10: #{tpu_custom_call.1} parent=5 // pred_check_branch
        %121 = sbr.rel (%p118) target = $region12
      $region11: #{tpu_custom_call.1} parent=5 // pred_region
        %s122 = ssub.s32 %s14, 1
      $region12: #{tpu_custom_call.1} parent=5 // pred_fallthru
        _
      %p123 = scmp.lt.s32.totalorder %s14, 2
      // Predicated region
      $region13: #{tpu_custom_call.1} parent=5 // pred_check
        %p124 = pneg %p123
      $region14: #{tpu_custom_call.1} parent=5 // pred_check_branch
        %126 = sbr.rel (%p124) target = $region16
      $region15: #{tpu_custom_call.1} parent=5 // pred_region
        // Predicated region
        $region17: #{tpu_custom_call.1} parent=15 // pred_check
          %p127 = pneg %p48
        $region18: #{tpu_custom_call.1} parent=15 // pred_check_branch
          %129 = sbr.rel (%p127) target = $region20
        $region19: #{tpu_custom_call.1} parent=15 // pred_region
          %s130 = sand.u32 %s38, 1
          %s131 = scalar_lea.sflag [#allocation4], %s130
          %s132 = sand.u32 %s38, 1
          %s133 = smul.addr %s132, 64
          %s134 = scalar_lea.vmem [#allocation3], %s133
          %s135 = sadd.s32 %s21, %s22
          %s137 = ssub.s32 1024, 1024
          %138 = vsyncadd %s131, %s137
          %s139 = smul.addr %s135, 8
          %s140 = smul.addr %s139, 128
          %s141 = scalar_lea.hbm %s0, %s140
          %s142 = sshll.u32 %s134, 4
          %s143 = int_to_ptr.vmem [resolvable:$true] %s142
          %148 = dma.hbm_to_vmem [thread:$0]  %s141, 1024, %s143, %s131, 512, 512, 32
        $region20: #{tpu_custom_call.1} parent=15 // pred_fallthru
          _
        // Predicated region
        $region21: #{tpu_custom_call.1} parent=15 // pred_check
          %p149 = pneg %p76
        $region22: #{tpu_custom_call.1} parent=15 // pred_check_branch
          %151 = sbr.rel (%p149) target = $region24
        $region23: #{tpu_custom_call.1} parent=15 // pred_region
          %s152 = sand.u32 %s66, 1
          %s153 = scalar_lea.sflag [#allocation6], %s152
          %s154 = sand.u32 %s66, 1
          %s155 = smul.addr %s154, 64
          %s156 = scalar_lea.vmem [#allocation5], %s155
          %s157 = sadd.s32 %s21, %s22
          %s159 = ssub.s32 1024, 1024
          %160 = vsyncadd %s153, %s159
          %s161 = smul.addr %s157, 8
          %s162 = smul.addr %s161, 128
          %s163 = scalar_lea.hbm %s1, %s162
          %s164 = sshll.u32 %s156, 4
          %s165 = int_to_ptr.vmem [resolvable:$true] %s164
          %170 = dma.hbm_to_vmem [thread:$0]  %s163, 1024, %s165, %s153, 512, 512, 32
        $region24: #{tpu_custom_call.1} parent=15 // pred_fallthru
          _
      $region16: #{tpu_custom_call.1} parent=5 // pred_fallthru
        _
      %p171 = scmp.le.s32.totalorder 1, %s14
      %p172 = scmp.lt.s32.totalorder %s14, 3
      %p173 = pnand %p171, %p172
      %p174 = pneg %p173
      // Predicated region
      $region25: #{tpu_custom_call.1} parent=5 // pred_check
        _
      $region26: #{tpu_custom_call.1} parent=5 // pred_check_branch
        %176 = sbr.rel (%p173) target = $region28
      $region27: #{tpu_custom_call.1} parent=5 // pred_region
        %s177 = ssub.s32 %s14, 1
        %s178 = sand.u32 %s41, 1
        %s179 = scalar_lea.sflag [#allocation4], %s178
        %s180 = sand.u32 %s41, 1
        %s181 = smul.addr %s180, 64
        %s182 = scalar_lea.vmem [#allocation3], %s181
        // Predicated region
        $region29: #{tpu_custom_call.1} parent=27 // pred_check
          %p183 = pneg %p54
        $region30: #{tpu_custom_call.1} parent=27 // pred_check_branch
          %185 = sbr.rel (%p183) target = $region32
        $region31: #{tpu_custom_call.1} parent=27 // pred_region
          %186 = dma.done %s179, 1024
        $region32: #{tpu_custom_call.1} parent=27 // pred_fallthru
          _
        %s187 = sand.u32 %s69, 1
        %s188 = scalar_lea.sflag [#allocation6], %s187
        %s189 = sand.u32 %s69, 1
        %s190 = smul.addr %s189, 64
        %s191 = scalar_lea.vmem [#allocation5], %s190
        // Predicated region
        $region33: #{tpu_custom_call.1} parent=27 // pred_check
          %p192 = pneg %p82
        $region34: #{tpu_custom_call.1} parent=27 // pred_check_branch
          %194 = sbr.rel (%p192) target = $region36
        $region35: #{tpu_custom_call.1} parent=27 // pred_region
          %195 = dma.done %s188, 1024
        $region36: #{tpu_custom_call.1} parent=27 // pred_fallthru
          _
        %s196 = sand.u32 %s41, 1
        %s197 = scalar_lea.sflag [#allocation4], %s196
        %s198 = sand.u32 %s41, 1
        %s199 = smul.addr %s198, 64
        %s200 = scalar_lea.vmem [#allocation3], %s199
        %p201 = pneg %p54
        %p202 = pneg %p51
        %s203 = sand.u32 %s69, 1
        %s204 = scalar_lea.sflag [#allocation6], %s203
        %s205 = sand.u32 %s69, 1
        %s206 = smul.addr %s205, 64
        %s207 = scalar_lea.vmem [#allocation5], %s206
        %p208 = pneg %p82
        %p209 = pneg %p79
        %p210 = pneg %p108
        %p211 = pneg %p105
        %p212 = scmp.lt.s32.totalorder %s23, 1
        %s213 = scalar_select %p212, %s23, 1
        %s214 = scalar_lea.vmem %s2, %s213
        %s215 = sadd.s32 %s23, %s24
        %s216 = sadd.s32 %s23, %s24
        %p217 = scmp.lt.s32.totalorder %s23, 1
        %s218 = scalar_select %p217, %s23, 1
        %s219 = scalar_lea.vmem %s2, %s218
        %p220 = scmp.eq.s32.totalorder %s24, 0
        // Predicated region
        $region37: #{tpu_custom_call.1} parent=27 // pred_check
          %p221 = pneg %p220
        $region38: #{tpu_custom_call.1} parent=27 // pred_check_branch
          %223 = sbr.rel (%p221) target = $region40
        $region39: #{tpu_custom_call.1} parent=27 // pred_region
          %224 = vst [vmem:[#allocation2] sm:$0xff] 0.0
          %225 = vst [vmem:[#allocation2 + $0x8] sm:$0xff] 0.0
          %226 = vst [vmem:[#allocation2 + $0x10] sm:$0xff] 0.0
          %227 = vst [vmem:[#allocation2 + $0x18] sm:$0xff] 0.0
          %228 = vst [vmem:[#allocation2 + $0x20] sm:$0xff] 0.0
          %229 = vst [vmem:[#allocation2 + $0x28] sm:$0xff] 0.0
          %230 = vst [vmem:[#allocation2 + $0x30] sm:$0xff] 0.0
          %231 = vst [vmem:[#allocation2 + $0x38] sm:$0xff] 0.0
        $region40: #{tpu_custom_call.1} parent=27 // pred_fallthru
          _
        %v232 = vld [vmem:[%s191] sm:$0xff]
        %v233 = vld [vmem:[%s191 + $0x8] sm:$0xff]
        %v234 = vld [vmem:[%s191 + $0x10] sm:$0xff]
        %v235 = vld [vmem:[%s191 + $0x18] sm:$0xff]
        %v236 = vld [vmem:[%s191 + $0x20] sm:$0xff]
        %v237 = vld [vmem:[%s191 + $0x28] sm:$0xff]
        %v238 = vld [vmem:[%s191 + $0x30] sm:$0xff]
        %v239 = vld [vmem:[%s191 + $0x38] sm:$0xff]
        %v240 = vld [vmem:[%s182] sm:$0xff]
        %v241 = vld [vmem:[%s182 + $0x8] sm:$0xff]
        %v242 = vld [vmem:[%s182 + $0x10] sm:$0xff]
        %v243 = vld [vmem:[%s182 + $0x18] sm:$0xff]
        %v244 = vld [vmem:[%s182 + $0x20] sm:$0xff]
        %v245 = vld [vmem:[%s182 + $0x28] sm:$0xff]
        %v246 = vld [vmem:[%s182 + $0x30] sm:$0xff]
        %v247 = vld [vmem:[%s182 + $0x38] sm:$0xff]
        %v248 = vsub.f32 %v232, %v240
        %v249 = vsub.f32 %v233, %v241
        %v250 = vsub.f32 %v234, %v242
        %v251 = vsub.f32 %v235, %v243
        %v252 = vsub.f32 %v236, %v244
        %v253 = vsub.f32 %v237, %v245
        %v254 = vsub.f32 %v238, %v246
        %v255 = vsub.f32 %v239, %v247
        %v256 = vld [vmem:[#allocation2] sm:$0xff]
        %v257 = vld [vmem:[#allocation2 + $0x8] sm:$0xff]
        %v258 = vld [vmem:[#allocation2 + $0x10] sm:$0xff]
        %v259 = vld [vmem:[#allocation2 + $0x18] sm:$0xff]
        %v260 = vld [vmem:[#allocation2 + $0x20] sm:$0xff]
        %v261 = vld [vmem:[#allocation2 + $0x28] sm:$0xff]
        %v262 = vld [vmem:[#allocation2 + $0x30] sm:$0xff]
        %v263 = vld [vmem:[#allocation2 + $0x38] sm:$0xff]
        %v264 = vadd.f32 %v248, 0.0
        %v265 = vadd.f32 %v249, 0.0
        %v266 = vadd.f32 %v250, 0.0
        %v267 = vadd.f32 %v251, 0.0
        %v268 = vadd.f32 %v252, 0.0
        %v269 = vadd.f32 %v253, 0.0
        %v270 = vadd.f32 %v254, 0.0
        %v271 = vadd.f32 %v255, 0.0
        %v272 = vadd.f32 %v256, %v264
        %v273 = vadd.f32 %v257, %v265
        %v274 = vadd.f32 %v258, %v266
        %v275 = vadd.f32 %v259, %v267
        %v276 = vadd.f32 %v260, %v268
        %v277 = vadd.f32 %v261, %v269
        %v278 = vadd.f32 %v262, %v270
        %v279 = vadd.f32 %v263, %v271
        %280 = vst [vmem:[#allocation2] sm:$0xff] %v272
        %281 = vst [vmem:[#allocation2 + $0x8] sm:$0xff] %v273
        %282 = vst [vmem:[#allocation2 + $0x10] sm:$0xff] %v274
        %283 = vst [vmem:[#allocation2 + $0x18] sm:$0xff] %v275
        %284 = vst [vmem:[#allocation2 + $0x20] sm:$0xff] %v276
        %285 = vst [vmem:[#allocation2 + $0x28] sm:$0xff] %v277
        %286 = vst [vmem:[#allocation2 + $0x30] sm:$0xff] %v278
        %287 = vst [vmem:[#allocation2 + $0x38] sm:$0xff] %v279
        // Predicated region
        $region41: #{tpu_custom_call.1} parent=27 // pred_check
          %p288 = pneg %p220
        $region42: #{tpu_custom_call.1} parent=27 // pred_check_branch
          %290 = sbr.rel (%p288) target = $region44
        $region43: #{tpu_custom_call.1} parent=27 // pred_region
          %v291 = vld [vmem:[#allocation2] sm:$0xff]
          %v292 = vld [vmem:[#allocation2 + $0x8] sm:$0xff]
          %v293 = vld [vmem:[#allocation2 + $0x10] sm:$0xff]
          %v294 = vld [vmem:[#allocation2 + $0x18] sm:$0xff]
          %v295 = vld [vmem:[#allocation2 + $0x20] sm:$0xff]
          %v296 = vld [vmem:[#allocation2 + $0x28] sm:$0xff]
          %v297 = vld [vmem:[#allocation2 + $0x30] sm:$0xff]
          %v298 = vld [vmem:[#allocation2 + $0x38] sm:$0xff]
          %v299 = vadd.f32 %v291, %v292
          %v300 = vadd.f32 %v299, %v293
          %v301 = vadd.f32 %v300, %v294
          %v302 = vadd.f32 %v301, %v295
          %v303 = vadd.f32 %v302, %v296
          %v304 = vadd.f32 %v303, %v297
          %v305 = vadd.f32 %v304, %v298
          %306 = vadd.xlane.f32.xlu0 %v305
          %v307 = vpop.xlane.xlu0 %306
          %v308 = vrot.slane %v307, 4
          %v309 = vadd.f32 %v307, %v308
          %v310 = vrot.slane %v309, 2
          %v311 = vadd.f32 %v309, %v310
          %v312 = vrot.slane %v311, 1
          %v313 = vadd.f32 %v311, %v312
          %s314 = vtos %v313
          %v315 = vstv %s314
          %vm316 = vcmask 0
          %317 = vst.msk [vmem:[%s219] sm:$0x1] %vm316, %v315
        $region44: #{tpu_custom_call.1} parent=27 // pred_fallthru
          _
        %p318 = scmp.lt.s32.totalorder %s23, 1
        %s319 = scalar_select %p318, %s23, 1
        %s320 = scalar_lea.vmem %s2, %s319
        // Predicated region
        $region45: #{tpu_custom_call.1} parent=27 // pred_check
          %p321 = pneg %p105
        $region46: #{tpu_custom_call.1} parent=27 // pred_check_branch
          %323 = sbr.rel (%p321) target = $region48
        $region47: #{tpu_custom_call.1} parent=27 // pred_region
          _
        $region48: #{tpu_custom_call.1} parent=27 // pred_fallthru
          _
      $region28: #{tpu_custom_call.1} parent=5 // pred_fallthru
        _
      %p324 = scmp.le.s32.totalorder 2, %s14
      // Predicated region
      $region49: #{tpu_custom_call.1} parent=5 // pred_check
        %p325 = pneg %p324
      $region50: #{tpu_custom_call.1} parent=5 // pred_check_branch
        %327 = sbr.rel (%p325) target = $region52
      $region51: #{tpu_custom_call.1} parent=5 // pred_region
        %s328 = ssub.s32 %s14, 2
        // Predicated region
        $region53: #{tpu_custom_call.1} parent=51 // pred_check
          %p329 = pneg %p111
        $region54: #{tpu_custom_call.1} parent=51 // pred_check_branch
          %331 = sbr.rel (%p329) target = $region56
        $region55: #{tpu_custom_call.1} parent=51 // pred_region
          %p332 = scmp.lt.s32.totalorder %s25, 1
          %s333 = scalar_select %p332, %s25, 1
          %s334 = scalar_lea.vmem %s2, %s333
        $region56: #{tpu_custom_call.1} parent=51 // pred_fallthru
          _
      $region52: #{tpu_custom_call.1} parent=5 // pred_fallthru
        _
    $region6: #{tpu_custom_call.1} parent=1 // loop_footer
      %s18 = sadd.s32 1, %s14
    $region7: #{tpu_custom_call.1} parent=1 // loop_footer_branch
      %13 = sbr.rel target = $region3
    $region8: #{tpu_custom_call.1} parent=1 // loop_exit
      _
    %335 = vsyncpa [#allocation4], 1
    %s336 = scalar_lea.sflag [#allocation4], 1
    %337 = vsyncpa %s336, 1
    %338 = vsyncpa [#allocation6], 1
    %s339 = scalar_lea.sflag [#allocation6], 1
    %340 = vsyncpa %s339, 1

</llo_original>
